<compile_context>
chip_gen: v7x
topology: tpu7x:2x2x1
jax: 0.10.0
libtpu: 0.0.40
codegen_flags: <defaults>
</compile_context>

<pallas_src>
import jax
import jax.numpy as jnp
from jax.experimental import pallas as pl
from jax.experimental.pallas import tpu as pltpu


def _identity_copy_kernel(x_ref, o_ref):
    # Lane/sublane-dense 2D tile in, same tile out. No relayout, no reshape.
    o_ref[...] = x_ref[...]


# ~2 MiB per block; in+out, each double-buffered => ~8 MiB live VMEM.
_TARGET_BLOCK_BYTES = 2 * 1024 * 1024
_VMEM_LIMIT_BYTES = 32 * 1024 * 1024  # <= physical on v5e/v6e (128 MiB) and v7x (64 MiB)


def _round_down(v, m):
    return max(m, (v // m) * m)


def _plan(n, flat, itemsize):
    """Choose (slab_shape, block_shape, grid, index_map) for the identity copy."""
    total = n * flat
    sub = max(8, 32 // itemsize)  # native sublane tile: 8 f32, 16 bf16, 32 int8

    if total % 128 == 0:
        # Total-flatten path: any row-major re-factorisation of the contiguous
        # buffer preserves element order, so pick a lane-dense width C and tile
        # rows with ~2 MiB fully-contiguous blocks.
        C = 128
        for cand in (2048, 1024, 512, 256):
            if total % cand == 0:
                C = cand
                break
        R = total // C
        tile_r = min(R, _round_down(_TARGET_BLOCK_BYTES // (C * itemsize), sub))
        slab = (R, C)
        block = (tile_r, C)
        grid = (pl.cdiv(R, tile_r),)
        index_map = lambda i: (i, 0)
        return slab, block, grid, index_map

    # Fallback (total not a multiple of 128): keep the (n, flat) slab and tile
    # whichever axis keeps blocks bounded and the pipeline multi-step.
    slab = (n, flat)
    row_bytes = flat * itemsize
    if row_bytes <= _TARGET_BLOCK_BYTES and n > sub:
        tile_n = min(n, _round_down(_TARGET_BLOCK_BYTES // row_bytes, sub))
        block = (tile_n, flat)
        grid = (pl.cdiv(n, tile_n),)
        index_map = lambda i: (i, 0)
    else:
        # TODO(synk): tiny-n + huge-odd-flat still yields sublane-sparse blocks;
        # acceptable for this rare fallback.
        if flat <= 128:
            tile_f = flat
        else:
            tile_f = min(
                _round_down(_TARGET_BLOCK_BYTES // (n * itemsize), 128),
                pl.cdiv(flat, 128) * 128,
            )
        block = (n, tile_f)
        grid = (pl.cdiv(flat, tile_f),)
        index_map = lambda j: (0, j)
    return slab, block, grid, index_map


def _flatten_impl(x):
    """Equivalent of torch `x.view(x.shape[0], -1)` for contiguous input."""
    n = x.shape[0]
    flat = 1
    for d in x.shape[1:]:
        flat *= d

    slab, block, grid, index_map = _plan(n, flat, x.dtype.itemsize)

    # Free metadata reshape: present the dense 2D slab to the kernel.
    x2d = x.reshape(slab)

    y2d = pl.pallas_call(
        _identity_copy_kernel,
        out_shape=jax.ShapeDtypeStruct(slab, x.dtype),
        grid=grid,
        in_specs=[pl.BlockSpec(block, index_map)],
        out_specs=pl.BlockSpec(block, index_map),
        input_output_aliases={0: 0},  # identity copy -> donate the input slab
        compiler_params=pltpu.CompilerParams(
            dimension_semantics=("parallel",),
            vmem_limit_bytes=_VMEM_LIMIT_BYTES,
        ),
    )(x2d)

    # Free metadata reshape back to the (batch, -1) view shape.
    return y2d.reshape(n, flat)


flatten = jax.jit(_flatten_impl)


if __name__ == "__main__":
    key = jax.random.PRNGKey(0)

    # 1) Small NCHW input consistent with a conv-feature-map flatten
    #    (total elements divisible by 128 -> total-flatten fast path).
    x = jax.random.normal(key, (2, 4, 16, 16), dtype=jnp.float32)
    ref = x.reshape(x.shape[0], -1)
    y = flatten(x)
    jax.block_until_ready(y)
    assert y.shape == (2, 4 * 16 * 16), y.shape
    assert y.dtype == x.dtype
    assert jnp.array_equal(y, ref), "flatten kernel mismatch vs reference"

    # 2) Odd-shaped input (total NOT divisible by 128) exercises the bounded fallback.
    x_odd = jax.random.normal(key, (4, 3, 5, 7), dtype=jnp.float32)
    ref_odd = x_odd.reshape(x_odd.shape[0], -1)
    y_odd = flatten(x_odd)
    jax.block_until_ready(y_odd)
    assert y_odd.shape == (4, 3 * 5 * 7), y_odd.shape
    assert jnp.array_equal(y_odd, ref_odd), "flatten kernel mismatch (odd shape)"

    print("KERNEL_OK")
</pallas_src>

<mosaic_0001>
module attributes {stable_mosaic.version = 11 : i64} {
  func.func @_identity_copy_kernel(%arg0: i32, %arg1: memref<1x2048xf32, #tpu.memory_space<vmem>>, %arg2: memref<1x2048xf32, #tpu.memory_space<vmem>>) attributes {dimension_semantics = [#tpu.dimension_semantics<parallel>], iteration_bounds = array<i64: 1>, scalar_prefetch = 0 : i64, scratch_operands = 0 : i64, tpu.core_type = #tpu.core_type<tc>, window_params = [{transform_indices = @transform_0, window_bounds = array<i64: 1, 2048>}, {transform_indices = @transform_1, window_bounds = array<i64: 1, 2048>}]} {
    %c0 = arith.constant 0 : index
    %c0_0 = arith.constant 0 : index
    %0 = vector.load %arg1[%c0, %c0_0] : memref<1x2048xf32, #tpu.memory_space<vmem>>, vector<1x2048xf32>
    %c0_1 = arith.constant 0 : index
    %c0_2 = arith.constant 0 : index
    %1 = vector.load %arg2[%c0_1, %c0_2] : memref<1x2048xf32, #tpu.memory_space<vmem>>, vector<1x2048xf32>
    tpu.vector_store %arg2[%c0_1, %c0_2], %0 {strides = array<i32>} : memref<1x2048xf32, #tpu.memory_space<vmem>>, vector<1x2048xf32>,
    return
  }
  func.func @transform_0(%arg0: i32) -> (i32, i32) {
    %c0_i32 = arith.constant 0 : i32
    %c0_i32_0 = arith.constant 0 : i32
    return %arg0, %c0_i32 : i32, i32
  }
  func.func @transform_1(%arg0: i32) -> (i32, i32) {
    %c0_i32 = arith.constant 0 : i32
    %c0_i32_0 = arith.constant 0 : i32
    return %arg0, %c0_i32 : i32, i32
  }
}

</mosaic_0001>

<llo_original>
// kernel: _flatten_impl.1
$region0: #{_flatten_impl.1}
  #allocation0 [shape = 'u32[]', space=smem, size = 0x4, offset = 0x4, fixed_abs, tag = 'smem constant byte address 0x4 - core index']
  #allocation1 [shape = 'u32[144,128]{1,0:T(1,128)}', space=vmem, size = 0x12000, scoped, tag = 'internal scratch']
  %s0 = inlined_call_operand.vmem [shape: f32[1,2048], index: 0, kind: input, shape index: {}, may-alias: {0,1}]
  %s1 = inlined_call_operand.vmem [shape: f32[1,2048], index: 1, kind: output, shape index: {}, may-alias: {0,1}]
  %s2 = sld [smem:[#allocation0]]
  $region14: #{_flatten_impl.1} parent=0
    _
  %s4 = ssub.s32 1, %s2
  %s5 = scalar_select 0, %s4, %s2
  // Predicated region
  $region2: #{_flatten_impl.1} parent=0 // pred_check
    _
  $region3: #{_flatten_impl.1} parent=0 // pred_check_branch
    %7 = sbr.rel (0) target = $region5
  $region4: #{_flatten_impl.1} parent=0 // pred_region
    _
  $region5: #{_flatten_impl.1} parent=0 // pred_fallthru
    _
  %v8 = vld [vmem:[%s0] sm:$0xff]
  %v9 = vld [vmem:[%s0 + $0x8] sm:$0xff]
  %10 = vst [vmem:[%s1] sm:$0xff] %v8
  %11 = vst [vmem:[%s1 + $0x8] sm:$0xff] %v9
  // Predicated region
  $region6: #{_flatten_impl.1} parent=0 // pred_check
    _
  $region7: #{_flatten_impl.1} parent=0 // pred_check_branch
    %13 = sbr.rel (0) target = $region9
  $region8: #{_flatten_impl.1} parent=0 // pred_region
    _
  $region9: #{_flatten_impl.1} parent=0 // pred_fallthru
    _
  // Predicated region
  $region10: #{_flatten_impl.1} parent=0 // pred_check
    _
  $region11: #{_flatten_impl.1} parent=0 // pred_check_branch
    %15 = sbr.rel (0) target = $region13
  $region12: #{_flatten_impl.1} parent=0 // pred_region
    _
  $region13: #{_flatten_impl.1} parent=0 // pred_fallthru
    _

</llo_original>
